<compile_context>
chip_gen: v6e
topology: v6e:2x2x1
jax: 0.10.0
libtpu: 0.0.40
codegen_flags: <defaults>
</compile_context>

<pallas_src>
import functools

import jax
import jax.numpy as jnp
from jax.experimental import pallas as pl
from jax.experimental.pallas import tpu as pltpu


def _round_up(x, m):
    return ((x + m - 1) // m) * m


def _soft_lower_bound_kernel(x_ref, o_ref, *, lower_bound, compute_dtype):
    # Numerically stable softplus: softplus(t) = max(t, 0) + log1p(exp(-|t|)),
    # matching torch.nn.functional.softplus including its linear regime.
    t = x_ref[...].astype(compute_dtype) - lower_bound
    sp = jnp.maximum(t, 0) + jnp.log1p(jnp.exp(-jnp.abs(t)))
    o_ref[...] = (sp + lower_bound).astype(o_ref.dtype)


class SoftLowerBound:
    """y = lower_bound + softplus(x - lower_bound), applied elementwise."""

    _FAST_PATH_ELEMS = 1024       # tiny tensors: fused XLA beats kernel launch
    _TARGET_TILE_BYTES = 2 << 20  # ~2 MiB tiles; 2x(in+out) double-buffered <= 16 MiB

    def __init__(self, lower_bound: float):
        self.lower_bound = float(lower_bound)

    def _xla_softplus(self, x):
        xf = x.astype(jnp.float32)
        return (self.lower_bound + jax.nn.softplus(xf - self.lower_bound)).astype(x.dtype)

    def __call__(self, x):
        orig_shape = x.shape
        dtype = x.dtype
        total = int(x.size)

        # Tiny tensors: pallas_call launch / pipeline overhead dominates.
        if total <= self._FAST_PATH_ELEMS:
            return self._xla_softplus(x)

        itemsize = jnp.dtype(dtype).itemsize
        # Native sublane packing: f32 -> 8 rows, bf16 -> 16, int8/fp8 -> 32.
        pack = max(8, 32 // itemsize)
        # bf16 VPU/EUP path on v6e/v7x; everything else computes in f32.
        compute_dtype = jnp.bfloat16 if dtype == jnp.bfloat16 else jnp.float32

        # Lane-dense column width: largest of {1024,512,256,128} dividing total;
        # otherwise 128, with the <128-element remainder handled by an XLA tail.
        cols = 128
        for c in (1024, 512, 256):
            if total % c == 0:
                cols = c
                break

        main = (total // cols) * cols   # == total unless total % 128 != 0
        rows = main // cols

        flat = x.reshape(-1)
        x2d = (flat if main == total else flat[:main]).reshape(rows, cols)

        # Tile rows: ~2 MiB footprint, a multiple of the sublane packing, and
        # at least 2 grid blocks for medium tensors (v7x has 2 TCs per chip).
        if rows < pack:
            tile_rows = rows            # equals full array dim -> allowed
        else:
            budget_rows = max(
                pack,
                (self._TARGET_TILE_BYTES // (cols * itemsize)) // pack * pack)
            tile_rows = min(budget_rows,
                            (rows // pack) * pack,
                            _round_up(pl.cdiv(rows, 2), pack))
            tile_rows = max(tile_rows, pack)

        grid = (pl.cdiv(rows, tile_rows),)
        tile_bytes = tile_rows * cols * itemsize
        # Scoped VMEM: double-buffered in + out tiles + headroom, capped at
        # 32 MiB so v7x (64 MiB physical per TC) keeps compiler scratch room.
        vmem_limit = int(min(max(8 * tile_bytes, 16 << 20), 32 << 20))

        kernel = functools.partial(
            _soft_lower_bound_kernel,
            lower_bound=self.lower_bound,
            compute_dtype=compute_dtype)

        out2d = pl.pallas_call(
            kernel,
            out_shape=jax.ShapeDtypeStruct((rows, cols), dtype),
            grid=grid,
            in_specs=[pl.BlockSpec((tile_rows, cols), lambda i: (i, 0))],
            out_specs=pl.BlockSpec((tile_rows, cols), lambda i: (i, 0)),
            compiler_params=pltpu.CompilerParams(
                dimension_semantics=("parallel",),
                vmem_limit_bytes=vmem_limit,
            ),
        )(x2d)

        if main == total:
            return out2d.reshape(orig_shape)

        # Misaligned remainder (< cols elements): plain XLA softplus, then join.
        tail_out = self._xla_softplus(flat[main:])
        return jnp.concatenate([out2d.reshape(-1), tail_out]).reshape(orig_shape)


def _reference(x, lower_bound):
    return (lower_bound
            + jax.nn.softplus(x.astype(jnp.float32) - lower_bound)
            ).astype(x.dtype)


if __name__ == "__main__":
    key = jax.random.PRNGKey(0)
    k1, k2, k3, k4 = jax.random.split(key, 4)
    lb = 0.5
    mod = SoftLowerBound(lb)

    # 1) Lane-aligned f32 tensor -> Pallas path (no pad / slice copies).
    x1 = jax.random.normal(k1, (2, 4, 16, 16), dtype=jnp.float32) * 3.0
    o1 = jax.block_until_ready(mod(x1))
    assert o1.shape == x1.shape and o1.dtype == x1.dtype
    assert jnp.allclose(o1, _reference(x1, lb), atol=1e-5, rtol=1e-5), "mismatch (x1)"

    # 2) Misaligned element count -> Pallas on 128-aligned main slab + XLA tail.
    x2 = jax.random.normal(k2, (5, 17, 31), dtype=jnp.float32) * 10.0
    o2 = jax.block_until_ready(mod(x2))
    assert o2.shape == x2.shape and o2.dtype == x2.dtype
    assert jnp.allclose(o2, _reference(x2, lb), atol=1e-5, rtol=1e-5), "mismatch (x2)"

    # 3) Tiny tensor -> XLA fast path.
    x3 = jax.random.normal(k3, (3, 7, 5), dtype=jnp.float32) * 4.0
    o3 = jax.block_until_ready(mod(x3))
    assert o3.shape == x3.shape and o3.dtype == x3.dtype
    assert jnp.allclose(o3, _reference(x3, lb), atol=1e-5, rtol=1e-5), "mismatch (x3)"

    # 4) bf16 tensor -> bf16 in-kernel compute path.
    x4 = (jax.random.normal(k4, (4, 8, 64), dtype=jnp.float32) * 2.0).astype(jnp.bfloat16)
    o4 = jax.block_until_ready(mod(x4))
    assert o4.shape == x4.shape and o4.dtype == x4.dtype
    assert jnp.allclose(o4.astype(jnp.float32),
                        _reference(x4, lb).astype(jnp.float32),
                        atol=1e-1, rtol=5e-2), "mismatch (x4)"

    print("KERNEL_OK")
</pallas_src>

<mosaic_0001>
module attributes {stable_mosaic.version = 11 : i64} {
  func.func @_soft_lower_bound_kernel(%arg0: i32, %arg1: memref<2x1024xf32, #tpu.memory_space<vmem>>, %arg2: memref<2x1024xf32, #tpu.memory_space<vmem>>) attributes {dimension_semantics = [#tpu.dimension_semantics<parallel>], iteration_bounds = array<i64: 1>, scalar_prefetch = 0 : i64, scratch_operands = 0 : i64, tpu.core_type = #tpu.core_type<tc>, window_params = [{transform_indices = @transform_0, window_bounds = array<i64: 2, 1024>}, {transform_indices = @transform_1, window_bounds = array<i64: 2, 1024>}]} {
    %c0 = arith.constant 0 : index
    %c0_0 = arith.constant 0 : index
    %0 = vector.load %arg1[%c0, %c0_0] : memref<2x1024xf32, #tpu.memory_space<vmem>>, vector<2x1024xf32>
    %cst = arith.constant 5.000000e-01 : f32
    %1 = vector.broadcast %cst : f32 to vector<2x1024xf32>
    %2 = arith.subf %0, %1 : vector<2x1024xf32>
    %cst_1 = arith.constant 0.000000e+00 : f32
    %3 = vector.broadcast %cst_1 : f32 to vector<2x1024xf32>
    %4 = arith.maximumf %2, %3 : vector<2x1024xf32>
    %5 = math.absf %2 : vector<2x1024xf32>
    %cst_2 = arith.constant 0.000000e+00 : f32
    %6 = vector.broadcast %cst_2 : f32 to vector<2x1024xf32>
    %7 = arith.subf %6, %5 : vector<2x1024xf32>
    %8 = math.exp %7 : vector<2x1024xf32>
    %9 = math.log1p %8 : vector<2x1024xf32>
    %10 = arith.addf %4, %9 : vector<2x1024xf32>
    %cst_3 = arith.constant 5.000000e-01 : f32
    %11 = vector.broadcast %cst_3 : f32 to vector<2x1024xf32>
    %12 = arith.addf %10, %11 : vector<2x1024xf32>
    %c0_4 = arith.constant 0 : index
    %c0_5 = arith.constant 0 : index
    %13 = vector.load %arg2[%c0_4, %c0_5] : memref<2x1024xf32, #tpu.memory_space<vmem>>, vector<2x1024xf32>
    tpu.vector_store %arg2[%c0_4, %c0_5], %12 {strides = array<i32>} : memref<2x1024xf32, #tpu.memory_space<vmem>>, vector<2x1024xf32>,
    return
  }
  func.func @transform_0(%arg0: i32) -> (i32, i32) {
    %c0_i32 = arith.constant 0 : i32
    %c0_i32_0 = arith.constant 0 : i32
    return %arg0, %c0_i32 : i32, i32
  }
  func.func @transform_1(%arg0: i32) -> (i32, i32) {
    %c0_i32 = arith.constant 0 : i32
    %c0_i32_0 = arith.constant 0 : i32
    return %arg0, %c0_i32 : i32, i32
  }
}

</mosaic_0001>

<llo_original>
// kernel: tpu_custom_call.1
$region0: #{tpu_custom_call.1}
  #allocation0 [shape = 'u32[]', space=smem, size = 0x4, offset = 0x4, fixed_abs, tag = 'smem constant byte address 0x4 - core index']
  #allocation1 [shape = 'u32[144,128]{1,0:T(1,128)}', space=vmem, size = 0x12000, scoped, tag = 'internal scratch']
  %s0 = inlined_call_operand.hbm [shape: f32[2,1024], index: 0, kind: input, shape index: {}]
  %s1 = inlined_call_operand.hbm [shape: f32[2,1024], index: 1, kind: output, shape index: {}]
  %s2 = sld [smem:[#allocation0]]
  $region18: #{tpu_custom_call.1} parent=0
    _
  %s4 = ssub.s32 1, %s2
  %s5 = scalar_select 0, %s4, %s2
  $region1: #{tpu_custom_call.1} parent=0
    #allocation2 [shape = 'u8[8192]{0}', space=vmem, size = 0x2000, scoped, tag = 'input window, operand 0, single buffered']
    #allocation3 [shape = 's32[1]{0}', space=sflag, size = 0x4, scoped, tag = 'scoped memory for tpu_custom_call.1']
    #allocation4 [shape = 's32[1]{0}', space=sflag, size = 0x4, scoped, tag = 'scoped memory for tpu_custom_call.1']
    #allocation5 [shape = 'u8[8192]{0}', space=vmem, size = 0x2000, scoped, tag = 'output window, operand 0, single buffered']
    %6 = vsyncpa [#allocation3], 0
    %7 = vsyncpa [#allocation4], 0
    // Predicated region
    $region2: #{tpu_custom_call.1} parent=1 // pred_check
      _
    $region3: #{tpu_custom_call.1} parent=1 // pred_check_branch
      %9 = sbr.rel (0) target = $region5
    $region4: #{tpu_custom_call.1} parent=1 // pred_region
      %s11 = ssub.s32 256, 256
      %12 = vsyncadd [#allocation3], %s11
      %s14 = sshll.u32 [#allocation2], 4
      %s15 = int_to_ptr.vmem [resolvable:$true] %s14
      %17 = dma.hbm_to_vmem [thread:$0]  %s0, 256, %s15, [#allocation3]
    $region5: #{tpu_custom_call.1} parent=1 // pred_fallthru
      _
    // Predicated region
    $region6: #{tpu_custom_call.1} parent=1 // pred_check
      _
    $region7: #{tpu_custom_call.1} parent=1 // pred_check_branch
      %19 = sbr.rel (0) target = $region9
    $region8: #{tpu_custom_call.1} parent=1 // pred_region
      %20 = dma.done [#allocation3], 256
    $region9: #{tpu_custom_call.1} parent=1 // pred_fallthru
      _
    %v21 = vld [vmem:[#allocation2] sm:$0xff]
    %v22 = vld [vmem:[#allocation2 + $0x8] sm:$0xff]
    %v23 = vsub.f32 %v21, 0.5
    %v24 = vsub.f32 %v22, 0.5
    %v25 = vmax.f32 %v23, 0.0
    %v26 = vmax.f32 %v24, 0.0
    %v27 = vand.u32 2147483647, %v23
    %v28 = vand.u32 2147483647, %v24
    %v29 = vsub.f32 0.0, %v27
    %v30 = vsub.f32 0.0, %v28
    %v31 = vmul.f32 %v29, 1.442695
    %v32 = vpow.pop %v31
    %v33 = vmul.f32 %v30, 1.442695
    %v34 = vpow.pop %v33
    %v35 = vadd.f32 %v32, 1.0
    %v36 = vlog2.pop %v35
    %v37 = vmul.f32 %v36, 0.6931472
    %v38 = vmul.f32 -0.5, %v32
    %v39 = vadd.f32 %v38, 1.0
    %v40 = vmul.f32 %v39, %v32
    %v41 = vand.u32 2147483647, %v32
    %vm42 = vcmp.lt.f32.partialorder %v41, 0.0004427343
    %v43 = vsel %vm42, %v40, %v37
    %v44 = vadd.f32 %v34, 1.0
    %v45 = vlog2.pop %v44
    %v46 = vmul.f32 %v45, 0.6931472
    %v47 = vmul.f32 -0.5, %v34
    %v48 = vadd.f32 %v47, 1.0
    %v49 = vmul.f32 %v48, %v34
    %v50 = vand.u32 2147483647, %v34
    %vm51 = vcmp.lt.f32.partialorder %v50, 0.0004427343
    %v52 = vsel %vm51, %v49, %v46
    %v53 = vadd.f32 %v25, %v43
    %v54 = vadd.f32 %v26, %v52
    %v55 = vadd.f32 %v53, 0.5
    %v56 = vadd.f32 %v54, 0.5
    %57 = vst [vmem:[#allocation5] sm:$0xff] %v55
    %58 = vst [vmem:[#allocation5 + $0x8] sm:$0xff] %v56
    // Predicated region
    $region10: #{tpu_custom_call.1} parent=1 // pred_check
      _
    $region11: #{tpu_custom_call.1} parent=1 // pred_check_branch
      %60 = sbr.rel (0) target = $region13
    $region12: #{tpu_custom_call.1} parent=1 // pred_region
      %s62 = ssub.s32 256, 256
      %63 = vsyncadd [#allocation4], %s62
      %s65 = sshll.u32 [#allocation5], 4
      %s66 = int_to_ptr.vmem [resolvable:$true] %s65
      %68 = dma.vmem_to_hbm [thread:$0]  %s66, 256, %s1, [#allocation4]
    $region13: #{tpu_custom_call.1} parent=1 // pred_fallthru
      _
    // Predicated region
    $region14: #{tpu_custom_call.1} parent=1 // pred_check
      _
    $region15: #{tpu_custom_call.1} parent=1 // pred_check_branch
      %70 = sbr.rel (0) target = $region17
    $region16: #{tpu_custom_call.1} parent=1 // pred_region
      %71 = dma.done [#allocation4], 256
    $region17: #{tpu_custom_call.1} parent=1 // pred_fallthru
      _
    %72 = vsyncpa [#allocation3], 1
    %73 = vsyncpa [#allocation4], 1

</llo_original>
